<compile_context>
chip_gen: v5e
topology: v5e:2x2
jax: 0.10.0
libtpu: 0.0.40
codegen_flags: <defaults>
</compile_context>

<pallas_src>
import jax
import jax.numpy as jnp
from jax.experimental import pallas as pl
from jax.experimental.pallas import tpu as pltpu


# ----------------------------------------------------------------------------
# Kernel
# ----------------------------------------------------------------------------
def attention_kernel(
    xflat_ref,   # (TB, S*H) f32  flattened lstm embeddings (activation stream)
    w1t_ref,     # (S*H, H)  bf16 fc[0] weight, pre-transposed
    b1_ref,      # (1, H)    f32
    w2t_ref,     # (H, H)    bf16 fc[3] weight, pre-transposed
    b2_ref,      # (1, H)    f32
    w3t_ref,     # (H, S)    bf16 fc[6] weight, pre-transposed (compact!)
    b3_ref,      # (1, S)    f32
    expand_ref,  # (S, S*H)  bf16 constant one-hot lane-expansion matrix
    o_ref,       # (TB, S*H) f32  output (flattened, lane-dense)
):
    xflat = xflat_ref[...]                        # f32 activations
    x_bf = xflat.astype(jnp.bfloat16)             # bf16 only for the MXU input

    # fc[0]: Linear(S*H -> H) + ReLU   (Dropout == identity in eval mode)
    h1 = jnp.dot(x_bf, w1t_ref[...], preferred_element_type=jnp.float32)
    h1 = jnp.maximum(h1 + b1_ref[...], 0.0)

    # fc[3]: Linear(H -> H) + ReLU     (Dropout == identity in eval mode)
    h2 = jnp.dot(h1.astype(jnp.bfloat16), w2t_ref[...],
                 preferred_element_type=jnp.float32)
    h2 = jnp.maximum(h2 + b2_ref[...], 0.0)

    # fc[6]: Linear(H -> S) + ReLU, COMPACT: (TB, S)
    attn = jnp.dot(h2.astype(jnp.bfloat16), w3t_ref[...],
                   preferred_element_type=jnp.float32)
    attn = jnp.maximum(attn + b3_ref[...], 0.0)

    # Softmax over the (compact) seq axis.
    m = jnp.max(attn, axis=1, keepdims=True)
    e = jnp.exp(attn - m)
    denom = jnp.sum(e, axis=1, keepdims=True)
    alpha = e * pl.reciprocal(denom, approx=True)          # (TB, S)

    # Lane-expand alpha to (TB, S*H) via a constant one-hot matmul:
    # expand[s, s*H + h] = 1, so alpha_e[:, c] == alpha[:, c // H].
    alpha_e = jnp.dot(alpha.astype(jnp.bfloat16), expand_ref[...],
                      preferred_element_type=jnp.float32)  # (TB, S*H)

    # attn_lstm_emd = lstm_emb * alpha, in the flattened lane-dense layout.
    o_ref[...] = (xflat * alpha_e).astype(o_ref.dtype)


# ----------------------------------------------------------------------------
# One-time parameter preparation (hoisted out of the per-call path)
# ----------------------------------------------------------------------------
def prepare_attention_params(w1, b1, w2, b2, w3, b3):
    """Pre-transpose / cast weights once at parameter-load time.

    Shapes follow nn.Linear (out, in):
      w1: (H, S*H), w2: (H, H), w3: (S, H)
    """
    H = w2.shape[0]
    S = w3.shape[0]
    params = {
        "w1t": jnp.asarray(w1).T.astype(jnp.bfloat16),          # (S*H, H)
        "b1": jnp.asarray(b1, jnp.float32).reshape(1, H),
        "w2t": jnp.asarray(w2).T.astype(jnp.bfloat16),          # (H, H)
        "b2": jnp.asarray(b2, jnp.float32).reshape(1, H),
        "w3t": jnp.asarray(w3).T.astype(jnp.bfloat16),          # (H, S)
        "b3": jnp.asarray(b3, jnp.float32).reshape(1, S),
        # Constant one-hot lane-expansion matrix: expand[s, s*H + h] = 1.
        "expand": jnp.repeat(jnp.eye(S, dtype=jnp.bfloat16), H, axis=1),
    }
    return params


# ----------------------------------------------------------------------------
# Forward wrapper
# ----------------------------------------------------------------------------
def _choose_batch_tile(B, SH, vmem_budget_bytes=40 * 1024 * 1024):
    """Pick an 8-aligned batch tile (default 256) that fits the VMEM budget.

    Budget covers double-buffered f32 input + output activation blocks
    (2 arrays * 2 buffers * TB * SH * 4 bytes).
    """
    tb = 256  # >= 256 keeps the 256-wide MXU on v6e/v7x better occupied
    while tb > 8 and 16 * tb * SH > vmem_budget_bytes:
        tb //= 2
    tb = max(tb, 8)
    if B <= tb:
        return B  # whole (small) batch in one full-dim block
    return tb


def attention_forward(x, params):
    """x: (B, S, H) float32, params from prepare_attention_params. -> (B, S, H)."""
    B, S, H = x.shape
    SH = S * H
    x_flat = x.reshape(B, SH)                     # free row-major reshape

    TB = _choose_batch_tile(B, SH)
    grid = (pl.cdiv(B, TB),)                      # masked partial last block

    act_spec = pl.BlockSpec((TB, SH), lambda i: (i, 0))

    def resident(shape):
        # Constant index map: weight/bias tiles stay resident in VMEM.
        return pl.BlockSpec(shape, lambda i, _n=len(shape): (0,) * _n)

    # VMEM estimate: double-buffered in/out activations + (double-buffered)
    # bf16 weights + f32 biases, with margin.  v5e's scoped default (~16 MiB)
    # is too small for realistic tiles, so set the limit explicitly.
    weight_elems = SH * H + H * H + H * S + S * SH
    act_bytes = 2 * 2 * TB * SH * 4
    wgt_bytes = 2 * 2 * weight_elems
    bias_bytes = 2 * 4 * (H + H + S)
    vmem_limit = int(min((act_bytes + wgt_bytes + bias_bytes) * 1.25 + (4 << 20),
                         64 << 20))

    # Advisory cost estimate so XLA schedules surrounding ops around the kernel.
    flops = int(2 * B * (SH * H + H * H + H * S + S * SH) + 8 * B * SH)
    transcendentals = int(B * (S + 1))
    bytes_accessed = int(2 * B * SH * 4 + 2 * weight_elems + 4 * (2 * H + S))

    out_flat = pl.pallas_call(
        attention_kernel,
        out_shape=jax.ShapeDtypeStruct((B, SH), x.dtype),
        grid_spec=pl.GridSpec(
            grid=grid,
            in_specs=[
                act_spec,                 # x_flat
                resident((SH, H)),        # w1t
                resident((1, H)),         # b1
                resident((H, H)),         # w2t
                resident((1, H)),         # b2
                resident((H, S)),         # w3t
                resident((1, S)),         # b3
                resident((S, SH)),        # expand
            ],
            out_specs=act_spec,
        ),
        compiler_params=pltpu.CompilerParams(
            dimension_semantics=("parallel",),
            vmem_limit_bytes=vmem_limit,
        ),
        cost_estimate=pl.CostEstimate(
            flops=flops,
            transcendentals=transcendentals,
            bytes_accessed=bytes_accessed,
        ),
    )(
        x_flat,
        params["w1t"], params["b1"],
        params["w2t"], params["b2"],
        params["w3t"], params["b3"],
        params["expand"],
    )

    return out_flat.reshape(B, S, H)              # free reshape back


# ----------------------------------------------------------------------------
# Pure-JAX f32 reference (mirrors the PyTorch forward, eval-mode dropout)
# ----------------------------------------------------------------------------
def attention_reference(x, w1, b1, w2, b2, w3, b3):
    B, S, H = x.shape
    xf = x.reshape(B, S * H)
    h1 = jax.nn.relu(xf @ w1.T + b1)
    h2 = jax.nn.relu(h1 @ w2.T + b2)
    attn = jax.nn.relu(h2 @ w3.T + b3)
    alpha = jax.nn.softmax(attn, axis=1)
    return x * alpha[:, :, None]


if __name__ == "__main__":
    # Small shapes consistent with the module: batch=2, seq_len=8, hidden_emb=32.
    B, S, H = 2, 8, 32

    key = jax.random.PRNGKey(0)
    kx, k1, k2, k3, k4, k5, k6 = jax.random.split(key, 7)

    x = jax.random.normal(kx, (B, S, H), dtype=jnp.float32)

    # Deterministic parameter init (shapes follow nn.Linear: (out, in)).
    w1 = jax.random.normal(k1, (H, S * H), dtype=jnp.float32) * 0.05
    b1 = jax.random.normal(k2, (H,), dtype=jnp.float32) * 0.05
    w2 = jax.random.normal(k3, (H, H), dtype=jnp.float32) * 0.05
    b2 = jax.random.normal(k4, (H,), dtype=jnp.float32) * 0.05
    w3 = jax.random.normal(k5, (S, H), dtype=jnp.float32) * 0.05
    b3 = jax.random.normal(k6, (S,), dtype=jnp.float32) * 0.05

    # Weight prep happens ONCE, outside the per-call path.
    params = prepare_attention_params(w1, b1, w2, b2, w3, b3)

    fwd = jax.jit(attention_forward)
    out = jax.block_until_ready(fwd(x, params))

    ref = attention_reference(x, w1, b1, w2, b2, w3, b3)
    assert out.shape == (B, S, H)
    # Tolerance accounts for bf16 matmul inputs, the bf16 alpha expansion and
    # the approx (EUP) reciprocal in the softmax denominator.
    assert jnp.allclose(out, ref, atol=2e-2, rtol=2e-2), (
        f"max abs err = {jnp.max(jnp.abs(out - ref))}"
    )

    print("KERNEL_OK")
</pallas_src>

<mosaic_0001>
module attributes {stable_mosaic.version = 11 : i64} {
  func.func @attention_kernel(%arg0: i32, %arg1: memref<2x256xf32, #tpu.memory_space<vmem>>, %arg2: memref<256x32xbf16, #tpu.memory_space<vmem>>, %arg3: memref<1x32xf32, #tpu.memory_space<vmem>>, %arg4: memref<32x32xbf16, #tpu.memory_space<vmem>>, %arg5: memref<1x32xf32, #tpu.memory_space<vmem>>, %arg6: memref<32x8xbf16, #tpu.memory_space<vmem>>, %arg7: memref<1x8xf32, #tpu.memory_space<vmem>>, %arg8: memref<8x256xbf16, #tpu.memory_space<vmem>>, %arg9: memref<2x256xf32, #tpu.memory_space<vmem>>) attributes {dimension_semantics = [#tpu.dimension_semantics<parallel>], iteration_bounds = array<i64: 1>, scalar_prefetch = 0 : i64, scratch_operands = 0 : i64, tpu.core_type = #tpu.core_type<tc>, window_params = [{transform_indices = @transform_0, window_bounds = array<i64: 2, 256>}, {pipeline_mode = #tpu.pipeline_mode<synchronous>, transform_indices = @transform_1, window_bounds = array<i64: 256, 32>}, {pipeline_mode = #tpu.pipeline_mode<synchronous>, transform_indices = @transform_2, window_bounds = array<i64: 1, 32>}, {pipeline_mode = #tpu.pipeline_mode<synchronous>, transform_indices = @transform_3, window_bounds = array<i64: 32, 32>}, {pipeline_mode = #tpu.pipeline_mode<synchronous>, transform_indices = @transform_4, window_bounds = array<i64: 1, 32>}, {pipeline_mode = #tpu.pipeline_mode<synchronous>, transform_indices = @transform_5, window_bounds = array<i64: 32, 8>}, {pipeline_mode = #tpu.pipeline_mode<synchronous>, transform_indices = @transform_6, window_bounds = array<i64: 1, 8>}, {pipeline_mode = #tpu.pipeline_mode<synchronous>, transform_indices = @transform_7, window_bounds = array<i64: 8, 256>}, {transform_indices = @transform_8, window_bounds = array<i64: 2, 256>}]} {
    %c0 = arith.constant 0 : index
    %c0_0 = arith.constant 0 : index
    %0 = vector.load %arg1[%c0, %c0_0] : memref<2x256xf32, #tpu.memory_space<vmem>>, vector<2x256xf32>
    %1 = arith.truncf %0 : vector<2x256xf32> to vector<2x256xbf16>
    %c0_1 = arith.constant 0 : index
    %c0_2 = arith.constant 0 : index
    %2 = vector.load %arg2[%c0_1, %c0_2] : memref<256x32xbf16, #tpu.memory_space<vmem>>, vector<256x32xbf16>
    %cst = arith.constant dense<0.000000e+00> : vector<2x32xf32>
    %3 = tpu.matmul %1, %2, %cst {dimension_numbers = #tpu.dot_dimension_numbers<[1], [0], [0], [1], [0, 0, 1, 1], [], []>} : vector<2x256xbf16>, vector<256x32xbf16>, vector<2x32xf32> -> vector<2x32xf32>
    %c0_3 = arith.constant 0 : index
    %c0_4 = arith.constant 0 : index
    %4 = vector.load %arg3[%c0_3, %c0_4] : memref<1x32xf32, #tpu.memory_space<vmem>>, vector<1x32xf32>
    %5 = vector.broadcast %4 : vector<1x32xf32> to vector<2x32xf32>
    %6 = arith.addf %3, %5 : vector<2x32xf32>
    %cst_5 = arith.constant 0.000000e+00 : f32
    %7 = vector.broadcast %cst_5 : f32 to vector<2x32xf32>
    %8 = arith.maximumf %6, %7 : vector<2x32xf32>
    %9 = arith.truncf %8 : vector<2x32xf32> to vector<2x32xbf16>
    %c0_6 = arith.constant 0 : index
    %c0_7 = arith.constant 0 : index
    %10 = vector.load %arg4[%c0_6, %c0_7] : memref<32x32xbf16, #tpu.memory_space<vmem>>, vector<32x32xbf16>
    %cst_8 = arith.constant dense<0.000000e+00> : vector<2x32xf32>
    %11 = tpu.matmul %9, %10, %cst_8 {dimension_numbers = #tpu.dot_dimension_numbers<[1], [0], [0], [1], [0, 0, 1, 1], [], []>} : vector<2x32xbf16>, vector<32x32xbf16>, vector<2x32xf32> -> vector<2x32xf32>
    %c0_9 = arith.constant 0 : index
    %c0_10 = arith.constant 0 : index
    %12 = vector.load %arg5[%c0_9, %c0_10] : memref<1x32xf32, #tpu.memory_space<vmem>>, vector<1x32xf32>
    %13 = vector.broadcast %12 : vector<1x32xf32> to vector<2x32xf32>
    %14 = arith.addf %11, %13 : vector<2x32xf32>
    %cst_11 = arith.constant 0.000000e+00 : f32
    %15 = vector.broadcast %cst_11 : f32 to vector<2x32xf32>
    %16 = arith.maximumf %14, %15 : vector<2x32xf32>
    %17 = arith.truncf %16 : vector<2x32xf32> to vector<2x32xbf16>
    %c0_12 = arith.constant 0 : index
    %c0_13 = arith.constant 0 : index
    %18 = vector.load %arg6[%c0_12, %c0_13] : memref<32x8xbf16, #tpu.memory_space<vmem>>, vector<32x8xbf16>
    %cst_14 = arith.constant dense<0.000000e+00> : vector<2x8xf32>
    %19 = tpu.matmul %17, %18, %cst_14 {dimension_numbers = #tpu.dot_dimension_numbers<[1], [0], [0], [1], [0, 0, 1, 1], [], []>} : vector<2x32xbf16>, vector<32x8xbf16>, vector<2x8xf32> -> vector<2x8xf32>
    %c0_15 = arith.constant 0 : index
    %c0_16 = arith.constant 0 : index
    %20 = vector.load %arg7[%c0_15, %c0_16] : memref<1x8xf32, #tpu.memory_space<vmem>>, vector<1x8xf32>
    %21 = vector.broadcast %20 : vector<1x8xf32> to vector<2x8xf32>
    %22 = arith.addf %19, %21 : vector<2x8xf32>
    %cst_17 = arith.constant 0.000000e+00 : f32
    %23 = vector.broadcast %cst_17 : f32 to vector<2x8xf32>
    %24 = arith.maximumf %22, %23 : vector<2x8xf32>
    %cst_18 = arith.constant dense<0xFF800000> : vector<2xf32>
    %25 = vector.multi_reduction <maximumf>, %24, %cst_18 [1] : vector<2x8xf32> to vector<2xf32>
    %26 = vector.shape_cast %25 : vector<2xf32> to vector<2x1xf32>
    %27 = vector.broadcast %26 : vector<2x1xf32> to vector<2x8xf32>
    %28 = arith.subf %24, %27 : vector<2x8xf32>
    %29 = math.exp %28 : vector<2x8xf32>
    %cst_19 = arith.constant dense<0.000000e+00> : vector<2xf32>
    %30 = vector.multi_reduction <add>, %29, %cst_19 [1] : vector<2x8xf32> to vector<2xf32>
    %31 = vector.shape_cast %30 : vector<2xf32> to vector<2x1xf32>
    %32 = tpu.reciprocal %31 {approx = true} : vector<2x1xf32> -> vector<2x1xf32>
    %33 = vector.broadcast %32 : vector<2x1xf32> to vector<2x8xf32>
    %34 = arith.mulf %29, %33 : vector<2x8xf32>
    %35 = arith.truncf %34 : vector<2x8xf32> to vector<2x8xbf16>
    %c0_20 = arith.constant 0 : index
    %c0_21 = arith.constant 0 : index
    %36 = vector.load %arg8[%c0_20, %c0_21] : memref<8x256xbf16, #tpu.memory_space<vmem>>, vector<8x256xbf16>
    %cst_22 = arith.constant dense<0.000000e+00> : vector<2x256xf32>
    %37 = tpu.matmul %35, %36, %cst_22 {dimension_numbers = #tpu.dot_dimension_numbers<[1], [0], [0], [1], [0, 0, 1, 1], [], []>} : vector<2x8xbf16>, vector<8x256xbf16>, vector<2x256xf32> -> vector<2x256xf32>
    %38 = arith.mulf %0, %37 : vector<2x256xf32>
    %c0_23 = arith.constant 0 : index
    %c0_24 = arith.constant 0 : index
    %39 = vector.load %arg9[%c0_23, %c0_24] : memref<2x256xf32, #tpu.memory_space<vmem>>, vector<2x256xf32>
    tpu.vector_store %arg9[%c0_23, %c0_24], %38 {strides = array<i32>} : memref<2x256xf32, #tpu.memory_space<vmem>>, vector<2x256xf32>,
    return
  }
  func.func @transform_0(%arg0: i32) -> (i32, i32) {
    %c0_i32 = arith.constant 0 : i32
    %c0_i32_0 = arith.constant 0 : i32
    return %arg0, %c0_i32 : i32, i32
  }
  func.func @transform_1(%arg0: i32) -> (i32, i32) {
    %c0_i32 = arith.constant 0 : i32
    %c0_i32_0 = arith.constant 0 : i32
    %c0_i32_1 = arith.constant 0 : i32
    return %c0_i32, %c0_i32_0 : i32, i32
  }
  func.func @transform_2(%arg0: i32) -> (i32, i32) {
    %c0_i32 = arith.constant 0 : i32
    %c0_i32_0 = arith.constant 0 : i32
    %c0_i32_1 = arith.constant 0 : i32
    return %c0_i32, %c0_i32_0 : i32, i32
  }
  func.func @transform_3(%arg0: i32) -> (i32, i32) {
    %c0_i32 = arith.constant 0 : i32
    %c0_i32_0 = arith.constant 0 : i32
    %c0_i32_1 = arith.constant 0 : i32
    return %c0_i32, %c0_i32_0 : i32, i32
  }
  func.func @transform_4(%arg0: i32) -> (i32, i32) {
    %c0_i32 = arith.constant 0 : i32
    %c0_i32_0 = arith.constant 0 : i32
    %c0_i32_1 = arith.constant 0 : i32
    return %c0_i32, %c0_i32_0 : i32, i32
  }
  func.func @transform_5(%arg0: i32) -> (i32, i32) {
    %c0_i32 = arith.constant 0 : i32
    %c0_i32_0 = arith.constant 0 : i32
    %c0_i32_1 = arith.constant 0 : i32
    return %c0_i32, %c0_i32_0 : i32, i32
  }
  func.func @transform_6(%arg0: i32) -> (i32, i32) {
    %c0_i32 = arith.constant 0 : i32
    %c0_i32_0 = arith.constant 0 : i32
    %c0_i32_1 = arith.constant 0 : i32
    return %c0_i32, %c0_i32_0 : i32, i32
  }
  func.func @transform_7(%arg0: i32) -> (i32, i32) {
    %c0_i32 = arith.constant 0 : i32
    %c0_i32_0 = arith.constant 0 : i32
    %c0_i32_1 = arith.constant 0 : i32
    return %c0_i32, %c0_i32_0 : i32, i32
  }
  func.func @transform_8(%arg0: i32) -> (i32, i32) {
    %c0_i32 = arith.constant 0 : i32
    %c0_i32_0 = arith.constant 0 : i32
    return %arg0, %c0_i32 : i32, i32
  }
}

</mosaic_0001>

<llo_original>
// kernel: attention_forward.1
$region0: #{attention_forward.1}
  #allocation0 [shape = 'u32[]', space=smem, size = 0x4, offset = 0x4, fixed_abs, tag = 'smem constant byte address 0x4 - core index']
  #allocation1 [shape = 'u32[72,128]{1,0:T(1,128)}', space=vmem, size = 0x9000, scoped, tag = 'internal scratch']
  %s0 = inlined_call_operand.vmem [shape: f32[2,256], index: 0, kind: input, shape index: {}]
  %s1 = inlined_call_operand.vmem [shape: bf16[256,32], index: 1, kind: input, shape index: {}]
  %s2 = inlined_call_operand.vmem [shape: f32[1,32], index: 2, kind: input, shape index: {}]
  %s3 = inlined_call_operand.vmem [shape: bf16[32,32], index: 3, kind: input, shape index: {}]
  %s4 = inlined_call_operand.vmem [shape: f32[1,32], index: 4, kind: input, shape index: {}]
  %s5 = inlined_call_operand.vmem [shape: bf16[32,8], index: 5, kind: input, shape index: {}]
  %s6 = inlined_call_operand.vmem [shape: f32[1,8], index: 6, kind: input, shape index: {}]
  %s7 = inlined_call_operand.vmem [shape: bf16[8,256], index: 7, kind: input, shape index: {}]
  %s8 = inlined_call_operand.vmem [shape: f32[2,256], index: 8, kind: output, shape index: {}]
  %s9 = sld [smem:[#allocation0]]
  $region42: #{attention_forward.1} parent=0
    _
  %s11 = ssub.s32 1, %s9
  %s12 = scalar_select 0, %s11, %s9
  // Predicated region
  $region2: #{attention_forward.1} parent=0 // pred_check
    _
  $region3: #{attention_forward.1} parent=0 // pred_check_branch
    %14 = sbr.rel (0) target = $region5
  $region4: #{attention_forward.1} parent=0 // pred_region
    _
  $region5: #{attention_forward.1} parent=0 // pred_fallthru
    _
  // Predicated region
  $region6: #{attention_forward.1} parent=0 // pred_check
    _
  $region7: #{attention_forward.1} parent=0 // pred_check_branch
    %16 = sbr.rel (0) target = $region9
  $region8: #{attention_forward.1} parent=0 // pred_region
    _
  $region9: #{attention_forward.1} parent=0 // pred_fallthru
    _
  // Predicated region
  $region10: #{attention_forward.1} parent=0 // pred_check
    _
  $region11: #{attention_forward.1} parent=0 // pred_check_branch
    %18 = sbr.rel (0) target = $region13
  $region12: #{attention_forward.1} parent=0 // pred_region
    _
  $region13: #{attention_forward.1} parent=0 // pred_fallthru
    _
  // Predicated region
  $region14: #{attention_forward.1} parent=0 // pred_check
    _
  $region15: #{attention_forward.1} parent=0 // pred_check_branch
    %20 = sbr.rel (0) target = $region17
  $region16: #{attention_forward.1} parent=0 // pred_region
    _
  $region17: #{attention_forward.1} parent=0 // pred_fallthru
    _
  // Predicated region
  $region18: #{attention_forward.1} parent=0 // pred_check
    _
  $region19: #{attention_forward.1} parent=0 // pred_check_branch
    %22 = sbr.rel (0) target = $region21
  $region20: #{attention_forward.1} parent=0 // pred_region
    _
  $region21: #{attention_forward.1} parent=0 // pred_fallthru
    _
  // Predicated region
  $region22: #{attention_forward.1} parent=0 // pred_check
    _
  $region23: #{attention_forward.1} parent=0 // pred_check_branch
    %24 = sbr.rel (0) target = $region25
  $region24: #{attention_forward.1} parent=0 // pred_region
    _
  $region25: #{attention_forward.1} parent=0 // pred_fallthru
    _
  // Predicated region
  $region26: #{attention_forward.1} parent=0 // pred_check
    _
  $region27: #{attention_forward.1} parent=0 // pred_check_branch
    %26 = sbr.rel (0) target = $region29
  $region28: #{attention_forward.1} parent=0 // pred_region
    _
  $region29: #{attention_forward.1} parent=0 // pred_fallthru
    _
  // Predicated region
  $region30: #{attention_forward.1} parent=0 // pred_check
    _
  $region31: #{attention_forward.1} parent=0 // pred_check_branch
    %28 = sbr.rel (0) target = $region33
  $region32: #{attention_forward.1} parent=0 // pred_region
    _
  $region33: #{attention_forward.1} parent=0 // pred_fallthru
    _
  %v30 = vld [vmem:[%s0] sm:$0xf]
  %32 = vst [vmem:[#allocation1] ss:$4 sm:$0xff] %v30
  %v33 = vld.sshfl [vmem:[#allocation1] sm:$0xff pattern:$0x73625140]
  %v34 = vld.sshfl [vmem:[#allocation1 + $0x8] sm:$0xff pattern:$0x73625140]
  %v37 = vpack.c.bf16 %v33, %v33
  %v38 = vpack.c.bf16 %v34, %v34
  %v39 = vld [vmem:[%s1] sm:$0xf]
  %v40 = vld [vmem:[%s1 + $0x4] sm:$0xf]
  %v41 = vld [vmem:[%s1 + $0x8] sm:$0xf]
  %v42 = vld [vmem:[%s1 + $0xc] sm:$0xf]
  %v43 = vld [vmem:[%s1 + $0x10] sm:$0xf]
  %v44 = vld [vmem:[%s1 + $0x14] sm:$0xf]
  %v45 = vld [vmem:[%s1 + $0x18] sm:$0xf]
  %v46 = vld [vmem:[%s1 + $0x1c] sm:$0xf]
  %v47 = vld [vmem:[%s1 + $0x20] sm:$0xf]
  %v48 = vld [vmem:[%s1 + $0x24] sm:$0xf]
  %v49 = vld [vmem:[%s1 + $0x28] sm:$0xf]
  %v50 = vld [vmem:[%s1 + $0x2c] sm:$0xf]
  %v51 = vld [vmem:[%s1 + $0x30] sm:$0xf]
  %v52 = vld [vmem:[%s1 + $0x34] sm:$0xf]
  %v53 = vld [vmem:[%s1 + $0x38] sm:$0xf]
  %v54 = vld [vmem:[%s1 + $0x3c] sm:$0xf]
  %v55 = vld [vmem:[%s1 + $0x40] sm:$0xf]
  %v56 = vld [vmem:[%s1 + $0x44] sm:$0xf]
  %v57 = vld [vmem:[%s1 + $0x48] sm:$0xf]
  %v58 = vld [vmem:[%s1 + $0x4c] sm:$0xf]
  %v59 = vld [vmem:[%s1 + $0x50] sm:$0xf]
  %v60 = vld [vmem:[%s1 + $0x54] sm:$0xf]
  %v61 = vld [vmem:[%s1 + $0x58] sm:$0xf]
  %v62 = vld [vmem:[%s1 + $0x5c] sm:$0xf]
  %v63 = vld [vmem:[%s1 + $0x60] sm:$0xf]
  %v64 = vld [vmem:[%s1 + $0x64] sm:$0xf]
  %v65 = vld [vmem:[%s1 + $0x68] sm:$0xf]
  %v66 = vld [vmem:[%s1 + $0x6c] sm:$0xf]
  %v67 = vld [vmem:[%s1 + $0x70] sm:$0xf]
  %v68 = vld [vmem:[%s1 + $0x74] sm:$0xf]
  %v69 = vld [vmem:[%s1 + $0x78] sm:$0xf]
  %v70 = vld [vmem:[%s1 + $0x7c] sm:$0xf]
  %v71 = vld [vmem:[%s2] sm:$0x1]
  %v73 = vperm.slane %v71, 0
  %v107 = vunpack.c.l.b16 %v39
  %v108 = vunpack.c.l.b16 %v40
  %v109 = vunpack.c.l.b16 %v41
  %v110 = vunpack.c.l.b16 %v42
  %v111 = vunpack.c.l.b16 %v43
  %v112 = vunpack.c.l.b16 %v44
  %v113 = vunpack.c.l.b16 %v45
  %v114 = vunpack.c.l.b16 %v46
  %v115 = vunpack.c.l.b16 %v47
  %v116 = vunpack.c.l.b16 %v48
  %v117 = vunpack.c.l.b16 %v49
  %v118 = vunpack.c.l.b16 %v50
  %v119 = vunpack.c.l.b16 %v51
  %v120 = vunpack.c.l.b16 %v52
  %v121 = vunpack.c.l.b16 %v53
  %v122 = vunpack.c.l.b16 %v54
  %v123 = vunpack.c.l.b16 %v55
  %v124 = vunpack.c.l.b16 %v56
  %v125 = vunpack.c.l.b16 %v57
  %v126 = vunpack.c.l.b16 %v58
  %v127 = vunpack.c.l.b16 %v59
  %v128 = vunpack.c.l.b16 %v60
  %v129 = vunpack.c.l.b16 %v61
  %v130 = vunpack.c.l.b16 %v62
  %v131 = vunpack.c.l.b16 %v63
  %v132 = vunpack.c.l.b16 %v64
  %v133 = vunpack.c.l.b16 %v65
  %v134 = vunpack.c.l.b16 %v66
  %v135 = vunpack.c.l.b16 %v67
  %v136 = vunpack.c.l.b16 %v68
  %v137 = vunpack.c.l.b16 %v69
  %v138 = vunpack.c.l.b16 %v70
  %v139 = vpack.c.b16 %v108, %v107
  %v140 = vpack.c.b16 %v110, %v109
  %v141 = vpack.c.b16 %v112, %v111
  %v142 = vpack.c.b16 %v114, %v113
  %v143 = vpack.c.b16 %v116, %v115
  %v144 = vpack.c.b16 %v118, %v117
  %v145 = vpack.c.b16 %v120, %v119
  %v146 = vpack.c.b16 %v122, %v121
  %v147 = vpack.c.b16 %v124, %v123
  %v148 = vpack.c.b16 %v126, %v125
  %v149 = vpack.c.b16 %v128, %v127
  %v150 = vpack.c.b16 %v130, %v129
  %v151 = vpack.c.b16 %v132, %v131
  %v152 = vpack.c.b16 %v134, %v133
  %v153 = vpack.c.b16 %v136, %v135
  %v154 = vpack.c.b16 %v138, %v137
  %171 = vmatpush.bf16.msra.mxu0 %v146
  %172 = vmatpush.bf16.msra.mxu0 %v145
  %173 = vmatpush.bf16.msra.mxu0 %v144
  %174 = vmatpush.bf16.msra.mxu0 %v143
  %175 = vmatpush.bf16.msra.mxu0 %v142
  %176 = vmatpush.bf16.msra.mxu0 %v141
  %177 = vmatpush.bf16.msra.mxu0 %v140
  %178 = vmatpush.bf16.msra.mxu0 %v139
  %179 = vmatmul.bf16.gmra.mxu0 %v37
  %v180 = vpop.f32.mrf.mxu0
  %v181 = vadd.f32 %v73, %v180
  %v182 = vpop.f32.mrf.mxu0
  %183 = vdwg.mxu0
  %184 = vmatpush.bf16.msra.mxu0 %v154
  %185 = vmatpush.bf16.msra.mxu0 %v153
  %186 = vmatpush.bf16.msra.mxu0 %v152
  %187 = vmatpush.bf16.msra.mxu0 %v151
  %188 = vmatpush.bf16.msra.mxu0 %v150
  %189 = vmatpush.bf16.msra.mxu0 %v149
  %190 = vmatpush.bf16.msra.mxu0 %v148
  %191 = vmatpush.bf16.msra.mxu0 %v147
  %192 = vmatmul.bf16.gmra.mxu0 %v38
  %v193 = vpop.f32.mrf.mxu0
  %v194 = vadd.f32 %v181, %v193
  %v195 = vpop.f32.mrf.mxu0
  %196 = vdwg.mxu0
  %v197 = vmax.f32 %v194, 0.0
  %v198 = vpack.c.bf16 %v197, %v197
  %v199 = vld [vmem:[%s3] sm:$0xf]
  %v200 = vld [vmem:[%s3 + $0x4] sm:$0xf]
  %v201 = vld [vmem:[%s3 + $0x8] sm:$0xf]
  %v202 = vld [vmem:[%s3 + $0xc] sm:$0xf]
  %v203 = vld [vmem:[%s4] sm:$0x1]
  %v205 = vperm.slane %v203, 0
  %v211 = vunpack.c.l.b16 %v199
  %v212 = vunpack.c.l.b16 %v200
  %v213 = vunpack.c.l.b16 %v201
  %v214 = vunpack.c.l.b16 %v202
  %v215 = vpack.c.b16 %v212, %v211
  %v216 = vpack.c.b16 %v214, %v213
  %vm219 = vcmask 261120
  %v221 = vsel %vm219, %v198, 0
  %223 = vmatpush.bf16.msra.mxu0 0
  %224 = vmatpush.bf16.msra.mxu0 0
  %225 = vmatpush.bf16.msra.mxu0 0
  %226 = vmatpush.bf16.msra.mxu0 0
  %227 = vmatpush.bf16.msra.mxu0 0
  %228 = vmatpush.bf16.msra.mxu0 0
  %229 = vmatpush.bf16.msra.mxu0 %v216
  %230 = vmatpush.bf16.msra.mxu0 %v215
  %231 = vmatmul.bf16.gmra.mxu0 %v221
  %v232 = vpop.f32.mrf.mxu0
  %v233 = vadd.f32 %v205, %v232
  %v234 = vpop.f32.mrf.mxu0
  %235 = vdwg.mxu0
  %v236 = vmax.f32 %v233, 0.0
  %v237 = vpack.c.bf16 %v236, %v236
  %v238 = vld [vmem:[%s5] sm:$0xf]
  %v239 = vld [vmem:[%s5 + $0x4] sm:$0xf]
  %v240 = vld [vmem:[%s5 + $0x8] sm:$0xf]
  %v241 = vld [vmem:[%s5 + $0xc] sm:$0xf]
  %v242 = vld [vmem:[%s6] sm:$0x1]
  %v244 = vperm.slane %v242, 0
  %v250 = vunpack.c.l.b16 %v238
  %v251 = vunpack.c.l.b16 %v239
  %v252 = vunpack.c.l.b16 %v240
  %v253 = vunpack.c.l.b16 %v241
  %v254 = vpack.c.b16 %v251, %v250
  %v255 = vpack.c.b16 %v253, %v252
  %v259 = vsel %vm219, %v237, 0
  %261 = vmatpush.bf16.msra.mxu0 0
  %262 = vmatpush.bf16.msra.mxu0 0
  %263 = vmatpush.bf16.msra.mxu0 0
  %264 = vmatpush.bf16.msra.mxu0 0
  %265 = vmatpush.bf16.msra.mxu0 0
  %266 = vmatpush.bf16.msra.mxu0 0
  %267 = vmatpush.bf16.msra.mxu0 %v255
  %268 = vmatpush.bf16.msra.mxu0 %v254
  %269 = vmatmul.bf16.gmra.mxu0 %v259
  %v270 = vpop.f32.mrf.mxu0
  %v271 = vadd.f32 %v244, %v270
  %v272 = vpop.f32.mrf.mxu0
  %273 = vdwg.mxu0
  %v274 = vmax.f32 %v271, 0.0
  %vm275 = vcmask 58368
  %v276 = vsel %vm275, %v274, -inf
  %277 = vmax.xlane.f32.xlu0 %v276
  %v278 = vpop.xlane.xlu0 %277
  %v279 = vsub.f32 %v274, %v278
  %v280 = vmul.f32 %v279, 1.442695
  %v281 = vpow.pop %v280
  %v282 = vsel %vm275, %v281, 0.0
  %283 = vadd.xlane.f32.xlu0 %v282
  %v284 = vpop.xlane.xlu0 %283
  %v285 = vrcp.pop %v284
  %v286 = vmul.f32 %v281, %v285
  %v287 = vpack.c.bf16 %v286, %v286
  %v288 = vld [vmem:[%s7] sm:$0xff]
  %v290 = vunpack.c.l.b16 %v288
  %v291 = vunpack.c.h.b16 %v288
  %v292 = vpack.c.b16 %v290, %v290
  %v293 = vpack.c.b16 %v291, %v291
  %vm294 = vcmask 64512
  %v296 = vsel %vm294, %v287, 0
  %vm298 = vcmask 1043456
  %v300 = vsel %vm298, %v292, 0
  %v303 = vsel %vm298, %v293, 0
  %305 = vmatpush.bf16.msra.mxu0 0
  %306 = vmatpush.bf16.msra.mxu0 0
  %307 = vmatpush.bf16.msra.mxu0 0
  %308 = vmatpush.bf16.msra.mxu0 0
  %309 = vmatpush.bf16.msra.mxu0 0
  %310 = vmatpush.bf16.msra.mxu0 0
  %311 = vmatpush.bf16.msra.mxu0 0
  %312 = vmatpush.bf16.msra.mxu0 %v300
  %313 = vmatmul.bf16.gmra.mxu0 %v296
  %v314 = vpop.f32.mrf.mxu0
  %v315 = vadd.f32 0.0, %v314
  %v316 = vpop.f32.mrf.mxu0
  %317 = vdwg.mxu0
  %318 = vmatpush.bf16.msra.mxu0 0
  %319 = vmatpush.bf16.msra.mxu0 0
  %320 = vmatpush.bf16.msra.mxu0 0
  %321 = vmatpush.bf16.msra.mxu0 0
  %322 = vmatpush.bf16.msra.mxu0 0
  %323 = vmatpush.bf16.msra.mxu0 0
  %324 = vmatpush.bf16.msra.mxu0 0
  %325 = vmatpush.bf16.msra.mxu0 %v303
  %326 = vmatmul.bf16.gmra.mxu0 %v296
  %v327 = vpop.f32.mrf.mxu0
  %v328 = vadd.f32 0.0, %v327
  %v329 = vpop.f32.mrf.mxu0
  %330 = vdwg.mxu0
  %v333 = vrot.slane %v328, 6
  %vm334 = vcmask 1041408
  %v335 = vsel %vm334, %v315, %v333
  %v337 = vmul.f32 %v30, %v335
  %338 = vst [vmem:[%s8] sm:$0xf] %v337
  // Predicated region
  $region34: #{attention_forward.1} parent=0 // pred_check
    _
  $region35: #{attention_forward.1} parent=0 // pred_check_branch
    %340 = sbr.rel (0) target = $region37
  $region36: #{attention_forward.1} parent=0 // pred_region
    _
  $region37: #{attention_forward.1} parent=0 // pred_fallthru
    _
  // Predicated region
  $region38: #{attention_forward.1} parent=0 // pred_check
    _
  $region39: #{attention_forward.1} parent=0 // pred_check_branch
    %342 = sbr.rel (0) target = $region41
  $region40: #{attention_forward.1} parent=0 // pred_region
    _
  $region41: #{attention_forward.1} parent=0 // pred_fallthru
    _

</llo_original>
